<compile_context>
chip_gen: v5e
topology: v5e:2x2
jax: 0.10.0
libtpu: 0.0.40
codegen_flags: <defaults>
</compile_context>

<pallas_src>
import functools

import jax
import jax.numpy as jnp
from jax.experimental import pallas as pl
from jax.experimental.pallas import tpu as pltpu

NEG_SLOPE = 0.01  # torch.nn.LeakyReLU default
H1, H2 = 128, 256  # hidden widths from the PyTorch module


def _leaky_relu(x):
    # max(x, a*x) == LeakyReLU_a(x) exactly because 0 < NEG_SLOPE < 1
    # (2 VPU ops/element vs cmp+mul+select).  If the slope is ever changed to
    # something >= 1, this identity breaks — revert to jnp.where then.
    return jnp.maximum(x, NEG_SLOPE * x)


def _round_up(n, m):
    return ((n + m - 1) // m) * m


def value_net_kernel(x_ref, w1_ref, b1_ref, w2_ref, b2_ref, w3_ref, b3_ref,
                     o_ref, *, compute_dtype):
    x = x_ref[...].astype(compute_dtype)

    # fc1 + LeakyReLU (MXU matmul, f32 accumulation; bias/activation in f32).
    h1 = jnp.dot(x, w1_ref[...], preferred_element_type=jnp.float32)
    h1 = _leaky_relu(h1 + b1_ref[...])

    # fc2 + LeakyReLU (MXU matmul, f32 accumulation).
    h2 = jnp.dot(h1.astype(compute_dtype), w2_ref[...],
                 preferred_element_type=jnp.float32)
    h2 = _leaky_relu(h2 + b2_ref[...])

    # fc3: single output lane -> VPU row-multiply + XLU lane reduction (f32)
    # instead of an N=1 MXU matmul that would pay a full K=256 systolic push.
    out = jnp.sum(h2 * w3_ref[...], axis=-1, keepdims=True) + b3_ref[0, 0]
    o_ref[...] = out.astype(o_ref.dtype)


def prepare_params(torch_params, compute_dtype=jnp.bfloat16):
    """One-time conversion from PyTorch convention (w: [out, in], b: [out])
    to the kernel layout ([in, out] weights in compute_dtype, f32 bias rows,
    f32 fc3 row/scalar)."""
    p = torch_params
    return {
        "w1": jnp.asarray(p["fc1_w"]).T.astype(compute_dtype),       # [S, 128]
        "b1": jnp.asarray(p["fc1_b"])[None, :].astype(jnp.float32),  # [1, 128]
        "w2": jnp.asarray(p["fc2_w"]).T.astype(compute_dtype),       # [128, 256]
        "b2": jnp.asarray(p["fc2_b"])[None, :].astype(jnp.float32),  # [1, 256]
        "w3": jnp.asarray(p["fc3_w"]).astype(jnp.float32),           # [1, 256] row
        "b3": jnp.asarray(p["fc3_b"]).reshape(1, 1).astype(jnp.float32),
    }


def value_net_forward(x, prepared, *, max_tile_b=4096, min_blocks=4,
                      compute_dtype=jnp.bfloat16):
    """x: [B, state_dim] float32; prepared: output of prepare_params.

    Note: each distinct B compiles a distinct padded shape — callers with a
    highly variable batch (RL rollouts) should bucket B before calling.
    """
    B, state_dim = x.shape

    # Tile selection: at least `min_blocks` grid steps (keeps both v7x
    # TensorCores busy; harmless extra ~us on single-TC v5e/v6e for tiny B),
    # tile capped at max_tile_b, tile a multiple of 8 (sublane), and padding
    # derived from the block count so tail waste stays small.
    num_blocks = max(min_blocks, pl.cdiv(B, max_tile_b))
    tile_b = max(8, _round_up(pl.cdiv(B, num_blocks), 8))
    padded_b = _round_up(B, tile_b)
    if padded_b != B:
        x = jnp.pad(x, ((0, padded_b - B), (0, 0)))
    num_blocks = padded_b // tile_b

    w1, b1 = prepared["w1"], prepared["b1"]
    w2, b2 = prepared["w2"], prepared["b2"]
    w3, b3 = prepared["w3"], prepared["b3"]

    # Weights/biases: full-array block at a constant block index -> fetched
    # once, resident in VMEM across the whole grid.
    def resident(a):
        return pl.BlockSpec(a.shape, lambda i: (0,) * a.ndim)

    kernel = functools.partial(value_net_kernel, compute_dtype=compute_dtype)

    flops = 2 * padded_b * (state_dim * H1 + H1 * H2 + H2)
    bytes_accessed = (
        padded_b * state_dim * x.dtype.itemsize
        + sum(int(a.size) * a.dtype.itemsize for a in (w1, b1, w2, b2, w3, b3))
        + padded_b * 4)

    out = pl.pallas_call(
        kernel,
        out_shape=jax.ShapeDtypeStruct((padded_b, 1), jnp.float32),
        grid=(num_blocks,),
        in_specs=[
            pl.BlockSpec((tile_b, state_dim), lambda i: (i, 0)),  # x streams
            resident(w1), resident(b1),
            resident(w2), resident(b2),
            resident(w3),
            pl.BlockSpec(memory_space=pltpu.MemorySpace.SMEM),    # b3 scalar
        ],
        out_specs=pl.BlockSpec((tile_b, 1), lambda i: (i, 0)),
        compiler_params=pltpu.CompilerParams(
            dimension_semantics=("parallel",),
            # v5e's scoped-VMEM default is 16 MiB; larger f32 tiles need ~16 MiB
            # (x/out blocks lane-padded to 128 + h1/h2 scratch). 32 MiB matches
            # the v6e/v7x default, so this only lifts v5e.
            vmem_limit_bytes=32 * 1024 * 1024,
        ),
        cost_estimate=pl.CostEstimate(
            flops=flops, transcendentals=0, bytes_accessed=bytes_accessed),
    )(x, w1, b1, w2, b2, w3, b3)

    return out[:B]


def init_params(key, state_dim):
    """Deterministic init mimicking torch.nn.Linear's U(-1/sqrt(fan_in), .)."""
    def linear(key, fan_in, fan_out):
        kw, kb = jax.random.split(key)
        bound = 1.0 / jnp.sqrt(fan_in)
        w = jax.random.uniform(kw, (fan_out, fan_in), jnp.float32,
                               -bound, bound)
        b = jax.random.uniform(kb, (fan_out,), jnp.float32, -bound, bound)
        return w, b

    k1, k2, k3 = jax.random.split(key, 3)
    p = {}
    p["fc1_w"], p["fc1_b"] = linear(k1, state_dim, H1)
    p["fc2_w"], p["fc2_b"] = linear(k2, H1, H2)
    p["fc3_w"], p["fc3_b"] = linear(k3, H2, 1)
    return p


def reference_forward(x, p):
    h1 = jax.nn.leaky_relu(x @ p["fc1_w"].T + p["fc1_b"], NEG_SLOPE)
    h2 = jax.nn.leaky_relu(h1 @ p["fc2_w"].T + p["fc2_b"], NEG_SLOPE)
    return h2 @ p["fc3_w"].T + p["fc3_b"]


if __name__ == "__main__":
    key = jax.random.PRNGKey(0)
    k_param, k_x1, k_x2 = jax.random.split(key, 3)

    state_dim = 32
    params = init_params(k_param, state_dim)

    # 1) Small batch, explicit f32 path (exact PyTorch semantics, tight tol).
    prepared_f32 = prepare_params(params, jnp.float32)
    x_small = jax.random.normal(k_x1, (8, state_dim), jnp.float32)
    out_small = jax.block_until_ready(
        value_net_forward(x_small, prepared_f32, compute_dtype=jnp.float32))
    ref_small = reference_forward(x_small, params)
    assert out_small.shape == (8, 1), out_small.shape
    assert jnp.allclose(out_small, ref_small, atol=1e-5, rtol=1e-5), (
        "f32 small-batch mismatch vs JAX reference")

    # 2) Batch not divisible by the tile (multi-block grid + padded tail),
    #    still f32 / tight tolerance.
    x_big = jax.random.normal(k_x2, (300, state_dim), jnp.float32)
    out_big = jax.block_until_ready(
        value_net_forward(x_big, prepared_f32, compute_dtype=jnp.float32))
    ref_big = reference_forward(x_big, params)
    assert out_big.shape == (300, 1), out_big.shape
    assert jnp.allclose(out_big, ref_big, atol=1e-5, rtol=1e-5), (
        "f32 tiled-batch mismatch vs JAX reference")

    # 3) Default bf16 MXU path (bf16-native on v5e/v6e/v7x), loose tolerance.
    prepared_bf16 = prepare_params(params)  # defaults to bf16 weights
    out_bf16 = jax.block_until_ready(value_net_forward(x_big, prepared_bf16))
    assert out_bf16.shape == (300, 1), out_bf16.shape
    assert jnp.allclose(out_bf16, ref_big, atol=1e-1, rtol=1e-1), (
        "bf16 default path diverged from reference beyond bf16 tolerance")

    print("KERNEL_OK")
</pallas_src>

<mosaic_0001>
module attributes {stable_mosaic.version = 11 : i64} {
  func.func @value_net_kernel(%arg0: i32, %arg1: memref<8x32xf32, #tpu.memory_space<vmem>>, %arg2: memref<32x128xf32, #tpu.memory_space<vmem>>, %arg3: memref<1x128xf32, #tpu.memory_space<vmem>>, %arg4: memref<128x256xf32, #tpu.memory_space<vmem>>, %arg5: memref<1x256xf32, #tpu.memory_space<vmem>>, %arg6: memref<1x256xf32, #tpu.memory_space<vmem>>, %arg7: memref<1x1xf32, #tpu.memory_space<smem>>, %arg8: memref<8x1xf32, #tpu.memory_space<vmem>>) attributes {dimension_semantics = [#tpu.dimension_semantics<parallel>], iteration_bounds = array<i64: 1>, scalar_prefetch = 0 : i64, scratch_operands = 0 : i64, tpu.core_type = #tpu.core_type<tc>, window_params = [{transform_indices = @transform_0, window_bounds = array<i64: 8, 32>}, {pipeline_mode = #tpu.pipeline_mode<synchronous>, transform_indices = @transform_1, window_bounds = array<i64: 32, 128>}, {pipeline_mode = #tpu.pipeline_mode<synchronous>, transform_indices = @transform_2, window_bounds = array<i64: 1, 128>}, {pipeline_mode = #tpu.pipeline_mode<synchronous>, transform_indices = @transform_3, window_bounds = array<i64: 128, 256>}, {pipeline_mode = #tpu.pipeline_mode<synchronous>, transform_indices = @transform_4, window_bounds = array<i64: 1, 256>}, {pipeline_mode = #tpu.pipeline_mode<synchronous>, transform_indices = @transform_5, window_bounds = array<i64: 1, 256>}, {transform_indices = @transform_6, window_bounds = array<i64: 1, 1>}, {transform_indices = @transform_7, window_bounds = array<i64: 8, 1>}]} {
    %c0 = arith.constant 0 : index
    %c0_0 = arith.constant 0 : index
    %0 = vector.load %arg1[%c0, %c0_0] : memref<8x32xf32, #tpu.memory_space<vmem>>, vector<8x32xf32>
    %c0_1 = arith.constant 0 : index
    %c0_2 = arith.constant 0 : index
    %1 = vector.load %arg2[%c0_1, %c0_2] : memref<32x128xf32, #tpu.memory_space<vmem>>, vector<32x128xf32>
    %cst = arith.constant dense<0.000000e+00> : vector<8x128xf32>
    %2 = tpu.matmul %0, %1, %cst {dimension_numbers = #tpu.dot_dimension_numbers<[1], [0], [0], [1], [0, 0, 1, 1], [], []>} : vector<8x32xf32>, vector<32x128xf32>, vector<8x128xf32> -> vector<8x128xf32>
    %c0_3 = arith.constant 0 : index
    %c0_4 = arith.constant 0 : index
    %3 = vector.load %arg3[%c0_3, %c0_4] : memref<1x128xf32, #tpu.memory_space<vmem>>, vector<1x128xf32>
    %4 = vector.broadcast %3 : vector<1x128xf32> to vector<8x128xf32>
    %5 = arith.addf %2, %4 : vector<8x128xf32>
    %cst_5 = arith.constant 0.00999999977 : f32
    %6 = vector.broadcast %cst_5 : f32 to vector<8x128xf32>
    %7 = arith.mulf %6, %5 : vector<8x128xf32>
    %8 = arith.maximumf %5, %7 : vector<8x128xf32>
    %c0_6 = arith.constant 0 : index
    %c0_7 = arith.constant 0 : index
    %9 = vector.load %arg4[%c0_6, %c0_7] : memref<128x256xf32, #tpu.memory_space<vmem>>, vector<128x256xf32>
    %cst_8 = arith.constant dense<0.000000e+00> : vector<8x256xf32>
    %10 = tpu.matmul %8, %9, %cst_8 {dimension_numbers = #tpu.dot_dimension_numbers<[1], [0], [0], [1], [0, 0, 1, 1], [], []>} : vector<8x128xf32>, vector<128x256xf32>, vector<8x256xf32> -> vector<8x256xf32>
    %c0_9 = arith.constant 0 : index
    %c0_10 = arith.constant 0 : index
    %11 = vector.load %arg5[%c0_9, %c0_10] : memref<1x256xf32, #tpu.memory_space<vmem>>, vector<1x256xf32>
    %12 = vector.broadcast %11 : vector<1x256xf32> to vector<8x256xf32>
    %13 = arith.addf %10, %12 : vector<8x256xf32>
    %cst_11 = arith.constant 0.00999999977 : f32
    %14 = vector.broadcast %cst_11 : f32 to vector<8x256xf32>
    %15 = arith.mulf %14, %13 : vector<8x256xf32>
    %16 = arith.maximumf %13, %15 : vector<8x256xf32>
    %c0_12 = arith.constant 0 : index
    %c0_13 = arith.constant 0 : index
    %17 = vector.load %arg6[%c0_12, %c0_13] : memref<1x256xf32, #tpu.memory_space<vmem>>, vector<1x256xf32>
    %18 = vector.broadcast %17 : vector<1x256xf32> to vector<8x256xf32>
    %19 = arith.mulf %16, %18 : vector<8x256xf32>
    %cst_14 = arith.constant dense<0.000000e+00> : vector<8xf32>
    %20 = vector.multi_reduction <add>, %19, %cst_14 [1] : vector<8x256xf32> to vector<8xf32>
    %21 = vector.shape_cast %20 : vector<8xf32> to vector<8x1xf32>
    %c0_15 = arith.constant 0 : index
    %c0_16 = arith.constant 0 : index
    %22 = memref.load %arg7[%c0_15, %c0_16] : memref<1x1xf32, #tpu.memory_space<smem>>
    %23 = vector.broadcast %22 : f32 to vector<8x1xf32>
    %24 = arith.addf %21, %23 : vector<8x1xf32>
    %c0_17 = arith.constant 0 : index
    %c0_18 = arith.constant 0 : index
    %25 = vector.load %arg8[%c0_17, %c0_18] : memref<8x1xf32, #tpu.memory_space<vmem>>, vector<8x1xf32>
    tpu.vector_store %arg8[%c0_17, %c0_18], %24 {strides = array<i32>} : memref<8x1xf32, #tpu.memory_space<vmem>>, vector<8x1xf32>,
    return
  }
  func.func @transform_0(%arg0: i32) -> (i32, i32) {
    %c0_i32 = arith.constant 0 : i32
    %c0_i32_0 = arith.constant 0 : i32
    return %arg0, %c0_i32 : i32, i32
  }
  func.func @transform_1(%arg0: i32) -> (i32, i32) {
    %c0_i32 = arith.constant 0 : i32
    %c0_i32_0 = arith.constant 0 : i32
    %c0_i32_1 = arith.constant 0 : i32
    return %c0_i32, %c0_i32_0 : i32, i32
  }
  func.func @transform_2(%arg0: i32) -> (i32, i32) {
    %c0_i32 = arith.constant 0 : i32
    %c0_i32_0 = arith.constant 0 : i32
    %c0_i32_1 = arith.constant 0 : i32
    return %c0_i32, %c0_i32_0 : i32, i32
  }
  func.func @transform_3(%arg0: i32) -> (i32, i32) {
    %c0_i32 = arith.constant 0 : i32
    %c0_i32_0 = arith.constant 0 : i32
    %c0_i32_1 = arith.constant 0 : i32
    return %c0_i32, %c0_i32_0 : i32, i32
  }
  func.func @transform_4(%arg0: i32) -> (i32, i32) {
    %c0_i32 = arith.constant 0 : i32
    %c0_i32_0 = arith.constant 0 : i32
    %c0_i32_1 = arith.constant 0 : i32
    return %c0_i32, %c0_i32_0 : i32, i32
  }
  func.func @transform_5(%arg0: i32) -> (i32, i32) {
    %c0_i32 = arith.constant 0 : i32
    %c0_i32_0 = arith.constant 0 : i32
    %c0_i32_1 = arith.constant 0 : i32
    return %c0_i32, %c0_i32_0 : i32, i32
  }
  func.func @transform_6(%arg0: i32) -> (i32, i32) {
    %c0_i32 = arith.constant 0 : i32
    %c0_i32_0 = arith.constant 0 : i32
    %c0_i32_1 = arith.constant 0 : i32
    return %c0_i32, %c0_i32_0 : i32, i32
  }
  func.func @transform_7(%arg0: i32) -> (i32, i32) {
    %c0_i32 = arith.constant 0 : i32
    %c0_i32_0 = arith.constant 0 : i32
    return %arg0, %c0_i32 : i32, i32
  }
}

</mosaic_0001>

<llo_original>
// kernel: tpu_custom_call.1
$region0: #{tpu_custom_call.1}
  #allocation0 [shape = 'u32[]', space=smem, size = 0x4, offset = 0x4, fixed_abs, tag = 'smem constant byte address 0x4 - core index']
  #allocation1 [shape = 'u32[72,128]{1,0:T(1,128)}', space=vmem, size = 0x9000, scoped, tag = 'internal scratch']
  #allocation2 [shape = 'f32[1,1]{1,0:T(1,128)S(6)}', space=smem, size = 0x200, scoped, tag = 'scoped memory for tpu_custom_call.1']
  %s0 = inlined_call_operand.hbm [shape: f32[8,32], index: 0, kind: input, shape index: {}]
  %s1 = inlined_call_operand.hbm [shape: f32[32,128], index: 1, kind: input, shape index: {}]
  %s2 = inlined_call_operand.hbm [shape: f32[1,128], index: 2, kind: input, shape index: {}]
  %s3 = inlined_call_operand.hbm [shape: f32[128,256], index: 3, kind: input, shape index: {}]
  %s4 = inlined_call_operand.vmem [shape: f32[1,256], index: 4, kind: input, shape index: {}]
  %s5 = inlined_call_operand.vmem [shape: f32[1,256], index: 5, kind: input, shape index: {}]
  %s6 = inlined_call_operand.<no memory space> [shape: f32[1,1], index: 6, kind: input, shape index: {}]
  %s7 = inlined_call_operand.vmem [shape: f32[8,1], index: 7, kind: output, shape index: {}]
  %s8 = sld [smem:[#allocation0]]
  $region54: #{tpu_custom_call.1} parent=0
    _
  %s10 = ssub.s32 1, %s8
  %s11 = scalar_select 0, %s10, %s8
  %12 = sst [smem:[#allocation2]] %s6
  $region1: #{tpu_custom_call.1} parent=0
    #allocation3 [shape = 'u8[4096]{0}', space=vmem, size = 0x1000, scoped, tag = 'input window, operand 0, single buffered']
    #allocation4 [shape = 's32[1]{0}', space=sflag, size = 0x4, scoped, tag = 'scoped memory for tpu_custom_call.1']
    #allocation5 [shape = 'u8[16384]{0}', space=vmem, size = 0x4000, scoped, tag = 'input window, operand 1, single buffered']
    #allocation6 [shape = 's32[1]{0}', space=sflag, size = 0x4, scoped, tag = 'scoped memory for tpu_custom_call.1']
    #allocation7 [shape = 'u8[512]{0}', space=vmem, size = 0x400, scoped, tag = 'input window, operand 2, single buffered']
    #allocation8 [shape = 'u8[131072]{0}', space=vmem, size = 0x20000, scoped, tag = 'input window, operand 3, single buffered']
    #allocation9 [shape = 's32[1]{0}', space=sflag, size = 0x4, scoped, tag = 'scoped memory for tpu_custom_call.1']
    %13 = vsyncpa [#allocation4], 0
    %14 = vsyncpa [#allocation6], 0
    %15 = vsyncpa [#allocation9], 0
    // Predicated region
    $region2: #{tpu_custom_call.1} parent=1 // pred_check
      _
    $region3: #{tpu_custom_call.1} parent=1 // pred_check_branch
      %17 = sbr.rel (0) target = $region5
    $region4: #{tpu_custom_call.1} parent=1 // pred_region
      %19 = vsyncadd [#allocation4], 0
      %s21 = sshll.u32 %s0, 4
      %s22 = int_to_ptr.hbm [resolvable:$true] %s21
      %s23 = sshll.u32 [#allocation3], 4
      %s24 = int_to_ptr.vmem [resolvable:$true] %s23
      %26 = dma.hbm_to_vmem [thread:$0]  %s22, 128, %s24, [#allocation4]
    $region5: #{tpu_custom_call.1} parent=1 // pred_fallthru
      _
    // Predicated region
    $region6: #{tpu_custom_call.1} parent=1 // pred_check
      _
    $region7: #{tpu_custom_call.1} parent=1 // pred_check_branch
      %28 = sbr.rel (0) target = $region9
    $region8: #{tpu_custom_call.1} parent=1 // pred_region
      %30 = vsyncadd [#allocation6], 0
      %s31 = sshll.u32 %s1, 4
      %s32 = int_to_ptr.hbm [resolvable:$true] %s31
      %s33 = sshll.u32 [#allocation5], 4
      %s34 = int_to_ptr.vmem [resolvable:$true] %s33
      %39 = dma.hbm_to_vmem [thread:$0]  %s32, 512, %s34, [#allocation6], 128, 128, 8
    $region9: #{tpu_custom_call.1} parent=1 // pred_fallthru
      _
    // Predicated region
    $region10: #{tpu_custom_call.1} parent=1 // pred_check
      _
    $region11: #{tpu_custom_call.1} parent=1 // pred_check_branch
      %41 = sbr.rel (0) target = $region13
    $region12: #{tpu_custom_call.1} parent=1 // pred_region
      %43 = vsyncadd [#allocation6], 0
      %s45 = sshll.u32 %s2, 4
      %s46 = int_to_ptr.hbm [resolvable:$true] %s45
      %s47 = sshll.u32 [#allocation7], 4
      %s48 = int_to_ptr.vmem [resolvable:$true] %s47
      %50 = dma.hbm_to_vmem [thread:$0]  %s46, 16, %s48, [#allocation6]
    $region13: #{tpu_custom_call.1} parent=1 // pred_fallthru
      _
    // Predicated region
    $region14: #{tpu_custom_call.1} parent=1 // pred_check
      _
    $region15: #{tpu_custom_call.1} parent=1 // pred_check_branch
      %52 = sbr.rel (0) target = $region17
    $region16: #{tpu_custom_call.1} parent=1 // pred_region
      %54 = vsyncadd [#allocation9], 0
      %s55 = sshll.u32 %s3, 4
      %s56 = int_to_ptr.hbm [resolvable:$true] %s55
      %s57 = sshll.u32 [#allocation8], 4
      %s58 = int_to_ptr.vmem [resolvable:$true] %s57
      %63 = dma.hbm_to_vmem [thread:$0]  %s56, 4096, %s58, [#allocation9], 256, 256, 16
    $region17: #{tpu_custom_call.1} parent=1 // pred_fallthru
      _
    // Predicated region
    $region18: #{tpu_custom_call.1} parent=1 // pred_check
      _
    $region19: #{tpu_custom_call.1} parent=1 // pred_check_branch
      %65 = sbr.rel (0) target = $region21
    $region20: #{tpu_custom_call.1} parent=1 // pred_region
      _
    $region21: #{tpu_custom_call.1} parent=1 // pred_fallthru
      _
    // Predicated region
    $region22: #{tpu_custom_call.1} parent=1 // pred_check
      _
    $region23: #{tpu_custom_call.1} parent=1 // pred_check_branch
      %67 = sbr.rel (0) target = $region25
    $region24: #{tpu_custom_call.1} parent=1 // pred_region
      _
    $region25: #{tpu_custom_call.1} parent=1 // pred_fallthru
      _
    // Predicated region
    $region26: #{tpu_custom_call.1} parent=1 // pred_check
      _
    $region27: #{tpu_custom_call.1} parent=1 // pred_check_branch
      %69 = sbr.rel (0) target = $region29
    $region28: #{tpu_custom_call.1} parent=1 // pred_region
      _
    $region29: #{tpu_custom_call.1} parent=1 // pred_fallthru
      _
    // Predicated region
    $region30: #{tpu_custom_call.1} parent=1 // pred_check
      _
    $region31: #{tpu_custom_call.1} parent=1 // pred_check_branch
      %71 = sbr.rel (0) target = $region33
    $region32: #{tpu_custom_call.1} parent=1 // pred_region
      %73 = dma.done [#allocation4], 128
    $region33: #{tpu_custom_call.1} parent=1 // pred_fallthru
      _
    // Predicated region
    $region34: #{tpu_custom_call.1} parent=1 // pred_check
      _
    $region35: #{tpu_custom_call.1} parent=1 // pred_check_branch
      %75 = sbr.rel (0) target = $region37
    $region36: #{tpu_custom_call.1} parent=1 // pred_region
      %77 = dma.done [#allocation6], 512
    $region37: #{tpu_custom_call.1} parent=1 // pred_fallthru
      _
    // Predicated region
    $region38: #{tpu_custom_call.1} parent=1 // pred_check
      _
    $region39: #{tpu_custom_call.1} parent=1 // pred_check_branch
      %79 = sbr.rel (0) target = $region41
    $region40: #{tpu_custom_call.1} parent=1 // pred_region
      %81 = dma.done [#allocation6], 16
    $region41: #{tpu_custom_call.1} parent=1 // pred_fallthru
      _
    // Predicated region
    $region42: #{tpu_custom_call.1} parent=1 // pred_check
      _
    $region43: #{tpu_custom_call.1} parent=1 // pred_check_branch
      %83 = sbr.rel (0) target = $region45
    $region44: #{tpu_custom_call.1} parent=1 // pred_region
      %85 = dma.done [#allocation9], 4096
    $region45: #{tpu_custom_call.1} parent=1 // pred_fallthru
      _
    %v86 = vld [vmem:[#allocation3] sm:$0xff]
    %v87 = vld [vmem:[#allocation5] sm:$0xff]
    %v88 = vld [vmem:[#allocation5 + $0x8] sm:$0xff]
    %v89 = vld [vmem:[#allocation5 + $0x10] sm:$0xff]
    %v90 = vld [vmem:[#allocation5 + $0x18] sm:$0xff]
    %v91 = vld [vmem:[#allocation7] sm:$0x1]
    %v93 = vperm.slane %v91, 0
    %vm95 = vcmask 261120
    %v97 = vsel %vm95, %v86, 0
    %99 = vmatpush.msra.mxu0 0.0
    %100 = vmatpush.msra.mxu0 0.0
    %101 = vmatpush.msra.mxu0 0.0
    %102 = vmatpush.msra.mxu0 0.0
    %103 = vmatpush.msra.mxu0 0.0
    %104 = vmatpush.msra.mxu0 0.0
    %105 = vmatpush.msra.mxu0 0.0
    %106 = vmatpush.msra.mxu0 0.0
    %107 = vmatpush.msra.mxu0 0.0
    %108 = vmatpush.msra.mxu0 0.0
    %109 = vmatpush.msra.mxu0 0.0
    %110 = vmatpush.msra.mxu0 0.0
    %111 = vmatpush.msra.mxu0 %v90
    %112 = vmatpush.msra.mxu0 %v89
    %113 = vmatpush.msra.mxu0 %v88
    %114 = vmatpush.msra.mxu0 %v87
    %115 = vmatmul.f32.gmra.mxu0 %v97
    %v116 = vpop.f32.mrf.mxu0
    %v117 = vadd.f32 %v93, %v116
    %118 = vdwg.mxu0
    %v119 = vmul.f32 %v117, 0.01
    %v120 = vmax.f32 %v117, %v119
    %v121 = vld [vmem:[#allocation8] sm:$0xff]
    %v122 = vld [vmem:[#allocation8 + $0x8] sm:$0xff]
    %v123 = vld [vmem:[#allocation8 + $0x10] sm:$0xff]
    %v124 = vld [vmem:[#allocation8 + $0x18] sm:$0xff]
    %v125 = vld [vmem:[#allocation8 + $0x20] sm:$0xff]
    %v126 = vld [vmem:[#allocation8 + $0x28] sm:$0xff]
    %v127 = vld [vmem:[#allocation8 + $0x30] sm:$0xff]
    %v128 = vld [vmem:[#allocation8 + $0x38] sm:$0xff]
    %v129 = vld [vmem:[#allocation8 + $0x40] sm:$0xff]
    %v130 = vld [vmem:[#allocation8 + $0x48] sm:$0xff]
    %v131 = vld [vmem:[#allocation8 + $0x50] sm:$0xff]
    %v132 = vld [vmem:[#allocation8 + $0x58] sm:$0xff]
    %v133 = vld [vmem:[#allocation8 + $0x60] sm:$0xff]
    %v134 = vld [vmem:[#allocation8 + $0x68] sm:$0xff]
    %v135 = vld [vmem:[#allocation8 + $0x70] sm:$0xff]
    %v136 = vld [vmem:[#allocation8 + $0x78] sm:$0xff]
    %v137 = vld [vmem:[#allocation8 + $0x80] sm:$0xff]
    %v138 = vld [vmem:[#allocation8 + $0x88] sm:$0xff]
    %v139 = vld [vmem:[#allocation8 + $0x90] sm:$0xff]
    %v140 = vld [vmem:[#allocation8 + $0x98] sm:$0xff]
    %v141 = vld [vmem:[#allocation8 + $0xa0] sm:$0xff]
    %v142 = vld [vmem:[#allocation8 + $0xa8] sm:$0xff]
    %v143 = vld [vmem:[#allocation8 + $0xb0] sm:$0xff]
    %v144 = vld [vmem:[#allocation8 + $0xb8] sm:$0xff]
    %v145 = vld [vmem:[#allocation8 + $0xc0] sm:$0xff]
    %v146 = vld [vmem:[#allocation8 + $0xc8] sm:$0xff]
    %v147 = vld [vmem:[#allocation8 + $0xd0] sm:$0xff]
    %v148 = vld [vmem:[#allocation8 + $0xd8] sm:$0xff]
    %v149 = vld [vmem:[#allocation8 + $0xe0] sm:$0xff]
    %v150 = vld [vmem:[#allocation8 + $0xe8] sm:$0xff]
    %v151 = vld [vmem:[#allocation8 + $0xf0] sm:$0xff]
    %v152 = vld [vmem:[#allocation8 + $0xf8] sm:$0xff]
    %v153 = vld [vmem:[%s4] sm:$0x3]
    %v155 = vperm.slane %v153, 0
    %v156 = vperm.slane %v153, 1
    %159 = vmatpush.msra.mxu0 %v151
    %160 = vmatpush.msra.mxu0 %v149
    %161 = vmatpush.msra.mxu0 %v147
    %162 = vmatpush.msra.mxu0 %v145
    %163 = vmatpush.msra.mxu0 %v143
    %164 = vmatpush.msra.mxu0 %v141
    %165 = vmatpush.msra.mxu0 %v139
    %166 = vmatpush.msra.mxu0 %v137
    %167 = vmatpush.msra.mxu0 %v135
    %168 = vmatpush.msra.mxu0 %v133
    %169 = vmatpush.msra.mxu0 %v131
    %170 = vmatpush.msra.mxu0 %v129
    %171 = vmatpush.msra.mxu0 %v127
    %172 = vmatpush.msra.mxu0 %v125
    %173 = vmatpush.msra.mxu0 %v123
    %174 = vmatpush.msra.mxu0 %v121
    %175 = vmatmul.f32.gmra.mxu0 %v120
    %v176 = vpop.f32.mrf.mxu0
    %v177 = vadd.f32 %v155, %v176
    %178 = vdwg.mxu0
    %179 = vmatpush.msra.mxu0 %v152
    %180 = vmatpush.msra.mxu0 %v150
    %181 = vmatpush.msra.mxu0 %v148
    %182 = vmatpush.msra.mxu0 %v146
    %183 = vmatpush.msra.mxu0 %v144
    %184 = vmatpush.msra.mxu0 %v142
    %185 = vmatpush.msra.mxu0 %v140
    %186 = vmatpush.msra.mxu0 %v138
    %187 = vmatpush.msra.mxu0 %v136
    %188 = vmatpush.msra.mxu0 %v134
    %189 = vmatpush.msra.mxu0 %v132
    %190 = vmatpush.msra.mxu0 %v130
    %191 = vmatpush.msra.mxu0 %v128
    %192 = vmatpush.msra.mxu0 %v126
    %193 = vmatpush.msra.mxu0 %v124
    %194 = vmatpush.msra.mxu0 %v122
    %195 = vmatmul.f32.gmra.mxu0 %v120
    %v196 = vpop.f32.mrf.mxu0
    %v197 = vadd.f32 %v156, %v196
    %198 = vdwg.mxu0
    %v199 = vmul.f32 %v177, 0.01
    %v200 = vmul.f32 %v197, 0.01
    %v201 = vmax.f32 %v177, %v199
    %v202 = vmax.f32 %v197, %v200
    %v203 = vld [vmem:[%s5] sm:$0x3]
    %v205 = vperm.slane %v203, 0
    %v206 = vperm.slane %v203, 1
    %v209 = vmul.f32 %v201, %v205
    %v210 = vmul.f32 %v202, %v206
    %v211 = vadd.f32 %v209, %v210
    %212 = vadd.xlane.f32.xlu0 %v211
    %v213 = vpop.xlane.xlu0 %212
    %s214 = sld [smem:[#allocation2]]
    %v215 = vstv %s214
    %v216 = vadd.f32 %v213, %v215
    %vm217 = vcmask 7168
    %218 = vst.msk [vmem:[%s7] sm:$0xff] %vm217, %v216
    // Predicated region
    $region46: #{tpu_custom_call.1} parent=1 // pred_check
      _
    $region47: #{tpu_custom_call.1} parent=1 // pred_check_branch
      %220 = sbr.rel (0) target = $region49
    $region48: #{tpu_custom_call.1} parent=1 // pred_region
      _
    $region49: #{tpu_custom_call.1} parent=1 // pred_fallthru
      _
    // Predicated region
    $region50: #{tpu_custom_call.1} parent=1 // pred_check
      _
    $region51: #{tpu_custom_call.1} parent=1 // pred_check_branch
      %222 = sbr.rel (0) target = $region53
    $region52: #{tpu_custom_call.1} parent=1 // pred_region
      _
    $region53: #{tpu_custom_call.1} parent=1 // pred_fallthru
      _
    %223 = vsyncpa [#allocation4], 1
    %224 = vsyncpa [#allocation6], 1
    %225 = vsyncpa [#allocation9], 1

</llo_original>
